<compile_context>
chip_gen: v6e
topology: v6e:2x2x1
jax: 0.10.0
libtpu: 0.0.40
codegen_flags: <defaults>
</compile_context>

<pallas_src>
import functools

import jax
import jax.numpy as jnp
from jax.experimental import pallas as pl
from jax.experimental.pallas import tpu as pltpu

_MIB = 1024 * 1024
_LANE = 128


def _scale_kernel(scale_ref, x_ref, o_ref):
    # One fused load -> VPU multiply -> store per vreg; scalar lives in SMEM.
    s = scale_ref[0, 0]
    o_ref[...] = (x_ref[...].astype(s.dtype) * s).astype(o_ref.dtype)


def _round_up(x: int, m: int) -> int:
    return -(-x // m) * m


def _sublane_packing(dtype) -> int:
    # Native sublane packing: 8 rows (32-bit), 16 (16-bit), 32 (8-bit).
    return max(8, 32 // jnp.dtype(dtype).itemsize)


def _vmem_capacity_bytes() -> int:
    try:
        return int(pltpu.get_tpu_info().vmem_capacity_bytes)
    except Exception:
        return 128 * _MIB  # conservative fallback: assume the 128-MiB family


@functools.partial(jax.jit, static_argnames=("donate_x",))
def scale_forward(x: jax.Array, scale, *, donate_x: bool = False) -> jax.Array:
    """Elementwise y = x * scale via a Pallas TPU kernel.

    `scale` is a traced scalar, so different scale values reuse one compiled
    kernel. Set donate_x=True only when the caller donates x and the output
    dtype matches x's dtype; otherwise XLA would insert a defensive copy.
    """
    orig_shape = x.shape
    in_dtype = x.dtype

    # torch promotion: int tensor * python float -> float32; floats keep dtype.
    out_dtype = jnp.result_type(x, scale)
    smem_dtype = jnp.float32 if jnp.issubdtype(out_dtype, jnp.floating) else jnp.int32
    scale_arr = jnp.asarray(scale).astype(smem_dtype).reshape(1, 1)

    n = x.size
    x_flat = x.reshape(-1)

    # Kernel handles the 128-aligned prefix; the (<128-element) tail, if any,
    # is handled in plain JAX — no full-array pad / output slice passes.
    n_main = (n // _LANE) * _LANE
    tail = n - n_main

    if n_main == 0:
        # Tiny input (<128 elements): launch overhead dominates anyway.
        return (x_flat * scale_arr[0, 0]).astype(out_dtype).reshape(orig_shape)

    x_main = x_flat if tail == 0 else x_flat[:n_main]
    rows = n_main // _LANE
    x2d = x_main.reshape(rows, _LANE)

    # --- Tile sizing (generation-aware) -------------------------------------
    in_item = jnp.dtype(in_dtype).itemsize
    out_item = jnp.dtype(out_dtype).itemsize
    packing = max(_sublane_packing(in_dtype), _sublane_packing(out_dtype))
    eff_row_bytes = _LANE * max(in_item, out_item)

    vmem_cap = _vmem_capacity_bytes()
    if vmem_cap <= 64 * _MIB:
        # v7x-class: high HBM BW -> amortize per-step overhead with big tiles,
        # but VMEM is only 64 MiB per TensorCore, so cap the scoped request.
        target_block_bytes = 8 * _MIB
        vmem_limit_cap = min(40 * _MIB, (vmem_cap * 5) // 8)
    else:
        # 128-MiB-VMEM family (v5e/v6e): 4 MiB blocks, default-safe VMEM cap.
        target_block_bytes = 4 * _MIB
        vmem_limit_cap = 32 * _MIB
    min_block_bytes = 1 * _MIB  # ~85% of HBM roofline is reached near 1 MiB

    tile_rows = max(packing, (target_block_bytes // eff_row_bytes) // packing * packing)
    min_tile_rows = max(packing, (min_block_bytes // eff_row_bytes) // packing * packing)

    if rows > tile_rows:
        # Aim for >= 4 grid steps (2 v7x TCs x pipeline depth >= 2), but never
        # shrink tiles below ~1 MiB.
        desired = max(min_tile_rows, _round_up(pl.cdiv(rows, 4), packing))
        tile_rows = min(tile_rows, desired)
    tile_rows = min(tile_rows, rows)

    grid = (pl.cdiv(rows, tile_rows),)

    in_tile_bytes = tile_rows * _LANE * in_item
    out_tile_bytes = tile_rows * _LANE * out_item
    # in + out, double-buffered, plus slack; clamp to a chip-safe cap.
    vmem_limit = min(
        vmem_limit_cap,
        max(16 * _MIB, 2 * (in_tile_bytes + out_tile_bytes) + 2 * _MIB),
    )

    alias = {}
    if donate_x and tail == 0 and in_dtype == out_dtype:
        # x2d is operand #1 (the SMEM scale scalar is operand #0).
        alias = {1: 0}

    out2d = pl.pallas_call(
        _scale_kernel,
        out_shape=jax.ShapeDtypeStruct((rows, _LANE), out_dtype),
        grid_spec=pltpu.PrefetchScalarGridSpec(
            num_scalar_prefetch=0,
            grid=grid,
            in_specs=[
                pl.BlockSpec(memory_space=pltpu.MemorySpace.SMEM),
                pl.BlockSpec((tile_rows, _LANE), lambda i: (i, 0)),
            ],
            out_specs=pl.BlockSpec((tile_rows, _LANE), lambda i: (i, 0)),
        ),
        compiler_params=pltpu.CompilerParams(
            dimension_semantics=("parallel",),
            vmem_limit_bytes=vmem_limit,
        ),
        input_output_aliases=alias,
    )(scale_arr, x2d)

    out_flat = out2d.reshape(-1)
    if tail:
        tail_out = (x_flat[n_main:] * scale_arr[0, 0]).astype(out_dtype)
        out_flat = jnp.concatenate([out_flat, tail_out])
    return out_flat.reshape(orig_shape)


if __name__ == "__main__":
    key = jax.random.PRNGKey(0)
    # NCHW input, consistent with PyTorch conv-style conventions.
    x = jax.random.normal(key, (2, 4, 16, 16), dtype=jnp.float32)
    scale = 2.5  # deterministic module parameter (Scale(scale=2.5))

    y = scale_forward(x, scale)
    y = jax.block_until_ready(y)

    # Correctness check against plain JAX reference.
    ref = x * scale
    assert y.shape == x.shape and y.dtype == ref.dtype
    assert jnp.allclose(y, ref, atol=1e-6, rtol=1e-6)

    print("KERNEL_OK")
</pallas_src>

<mosaic_0001>
module attributes {stable_mosaic.version = 11 : i64} {
  func.func @_scale_kernel(%arg0: i32, %arg1: memref<1x1xf32, #tpu.memory_space<smem>>, %arg2: memref<16x128xf32, #tpu.memory_space<vmem>>, %arg3: memref<16x128xf32, #tpu.memory_space<vmem>>) attributes {dimension_semantics = [#tpu.dimension_semantics<parallel>], iteration_bounds = array<i64: 1>, scalar_prefetch = 0 : i64, scratch_operands = 0 : i64, tpu.core_type = #tpu.core_type<tc>, window_params = [{transform_indices = @transform_0, window_bounds = array<i64: 1, 1>}, {transform_indices = @transform_1, window_bounds = array<i64: 16, 128>}, {transform_indices = @transform_2, window_bounds = array<i64: 16, 128>}]} {
    %c0 = arith.constant 0 : index
    %c0_0 = arith.constant 0 : index
    %0 = memref.load %arg1[%c0, %c0_0] : memref<1x1xf32, #tpu.memory_space<smem>>
    %c0_1 = arith.constant 0 : index
    %c0_2 = arith.constant 0 : index
    %1 = vector.load %arg2[%c0_1, %c0_2] : memref<16x128xf32, #tpu.memory_space<vmem>>, vector<16x128xf32>
    %2 = vector.broadcast %0 : f32 to vector<16x128xf32>
    %3 = arith.mulf %1, %2 : vector<16x128xf32>
    %c0_3 = arith.constant 0 : index
    %c0_4 = arith.constant 0 : index
    %4 = vector.load %arg3[%c0_3, %c0_4] : memref<16x128xf32, #tpu.memory_space<vmem>>, vector<16x128xf32>
    tpu.vector_store %arg3[%c0_3, %c0_4], %3 {strides = array<i32>} : memref<16x128xf32, #tpu.memory_space<vmem>>, vector<16x128xf32>,
    return
  }
  func.func @transform_0(%arg0: i32) -> (i32, i32) {
    %c0_i32 = arith.constant 0 : i32
    %c0_i32_0 = arith.constant 0 : i32
    %c0_i32_1 = arith.constant 0 : i32
    return %c0_i32, %c0_i32_0 : i32, i32
  }
  func.func @transform_1(%arg0: i32) -> (i32, i32) {
    %c0_i32 = arith.constant 0 : i32
    %c0_i32_0 = arith.constant 0 : i32
    return %arg0, %c0_i32 : i32, i32
  }
  func.func @transform_2(%arg0: i32) -> (i32, i32) {
    %c0_i32 = arith.constant 0 : i32
    %c0_i32_0 = arith.constant 0 : i32
    return %arg0, %c0_i32 : i32, i32
  }
}

</mosaic_0001>

<llo_original>
// kernel: scale_forward.1
$region0: #{scale_forward.1}
  #allocation0 [shape = 'u32[]', space=smem, size = 0x4, offset = 0x4, fixed_abs, tag = 'smem constant byte address 0x4 - core index']
  #allocation1 [shape = 'u32[144,128]{1,0:T(1,128)}', space=vmem, size = 0x12000, scoped, tag = 'internal scratch']
  #allocation2 [shape = 'f32[1,1]{1,0:T(1,128)S(6)}', space=smem, size = 0x200, scoped, tag = 'scoped memory for scale_forward.1']
  %s0 = inlined_call_operand.<no memory space> [shape: f32[1,1], index: 0, kind: input, shape index: {}]
  %s1 = inlined_call_operand.vmem [shape: f32[16,128], index: 1, kind: input, shape index: {}]
  %s2 = inlined_call_operand.vmem [shape: f32[16,128], index: 2, kind: output, shape index: {}]
  %s3 = sld [smem:[#allocation0]]
  $region18: #{scale_forward.1} parent=0
    _
  %s5 = ssub.s32 1, %s3
  %s6 = scalar_select 0, %s5, %s3
  %7 = sst [smem:[#allocation2]] %s0
  // Predicated region
  $region2: #{scale_forward.1} parent=0 // pred_check
    _
  $region3: #{scale_forward.1} parent=0 // pred_check_branch
    %9 = sbr.rel (0) target = $region5
  $region4: #{scale_forward.1} parent=0 // pred_region
    _
  $region5: #{scale_forward.1} parent=0 // pred_fallthru
    _
  // Predicated region
  $region6: #{scale_forward.1} parent=0 // pred_check
    _
  $region7: #{scale_forward.1} parent=0 // pred_check_branch
    %11 = sbr.rel (0) target = $region9
  $region8: #{scale_forward.1} parent=0 // pred_region
    _
  $region9: #{scale_forward.1} parent=0 // pred_fallthru
    _
  %s12 = sld [smem:[#allocation2]]
  %v13 = vld [vmem:[%s1] sm:$0xff]
  %v14 = vld [vmem:[%s1 + $0x8] sm:$0xff]
  %v15 = vstv %s12
  %v16 = vmul.f32 %v13, %v15
  %v17 = vmul.f32 %v14, %v15
  %18 = vst [vmem:[%s2] sm:$0xff] %v16
  %19 = vst [vmem:[%s2 + $0x8] sm:$0xff] %v17
  // Predicated region
  $region10: #{scale_forward.1} parent=0 // pred_check
    _
  $region11: #{scale_forward.1} parent=0 // pred_check_branch
    %21 = sbr.rel (0) target = $region13
  $region12: #{scale_forward.1} parent=0 // pred_region
    _
  $region13: #{scale_forward.1} parent=0 // pred_fallthru
    _
  // Predicated region
  $region14: #{scale_forward.1} parent=0 // pred_check
    _
  $region15: #{scale_forward.1} parent=0 // pred_check_branch
    %23 = sbr.rel (0) target = $region17
  $region16: #{scale_forward.1} parent=0 // pred_region
    _
  $region17: #{scale_forward.1} parent=0 // pred_fallthru
    _

</llo_original>
